<compile_context>
chip_gen: v5e
topology: v5e:2x2
jax: 0.10.0
libtpu: 0.0.40
codegen_flags: <defaults>
</compile_context>

<pallas_src>
import functools

import jax
import jax.numpy as jnp
from jax import lax
from jax.experimental import pallas as pl
from jax.experimental.pallas import tpu as pltpu


def _round_up(a: int, b: int) -> int:
    return ((a + b - 1) // b) * b


def _round_down(a: int, b: int) -> int:
    return (a // b) * b


def _gating_kernel(x_ref, w_ref, o_ref, *, num_moe: int):
    # x_ref: (TILE_T, dim) native dtype   w_ref: (num_moe_pad, dim) bf16
    # o_ref: (TILE_T, num_moe_pad) f32
    x = x_ref[...].astype(jnp.bfloat16)   # in-kernel cast: no extra HBM pass
    w = w_ref[...]
    # x @ w.T on the MXU, f32 accumulation.
    logits = lax.dot_general(
        x, w,
        dimension_numbers=(((1,), (1,)), ((), ())),
        preferred_element_type=jnp.float32,
    )  # (TILE_T, num_moe_pad) f32

    # Mask padded expert columns so they get zero probability (static check:
    # no mask emitted when num_moe is already a multiple of 128).
    if num_moe < logits.shape[-1]:
        col = lax.broadcasted_iota(jnp.int32, logits.shape, 1)
        logits = jnp.where(col < num_moe, logits, -jnp.inf)

    # Numerically stable softmax along the expert axis (matches nn.Softmax(dim=-1)).
    m = jnp.max(logits, axis=-1, keepdims=True)
    e = jnp.exp(logits - m)
    denom = jnp.sum(e, axis=-1, keepdims=True)
    probs = e * pl.reciprocal(denom, approx=False)  # exact: keeps sum-to-1 tight
    o_ref[...] = probs.astype(o_ref.dtype)


def dense_gating_forward(x, weight, *, tile_t: int | None = None,
                         return_padded: bool = False):
    """Forward of Dense gating.

    x:      (..., dim) float array (e.g. (num_groups, tokens_per_group, dim)),
            passed to the kernel at its native dtype (f32 or bf16).
    weight: (num_moe, dim) — same layout as nn.Linear.weight (no transpose).
    Returns softmax probabilities, float32:
      shape (..., num_moe)           if return_padded=False (default)
      shape (..., round_up(num_moe,128)) if return_padded=True (padded experts
            have exactly-zero probability; lets callers skip the narrowing
            relayout and slice/top-k downstream instead).
    Precision contract: the contraction is done in bf16 on the MXU with f32
    accumulation (not a true f32 nn.Linear).
    """
    *lead, dim = x.shape
    num_moe = weight.shape[0]

    x2d = x.reshape(-1, dim)          # no dtype cast, no token-axis padding
    T = x2d.shape[0]

    # Lane-dense expert axis.
    num_moe_pad = _round_up(num_moe, 128)

    # Weight is tiny: cast + pad on the XLA side (negligible HBM traffic).
    w_c = weight.astype(jnp.bfloat16)
    if num_moe_pad != num_moe:
        w_c = jnp.pad(w_c, ((0, num_moe_pad - num_moe), (0, 0)))

    x_itemsize = jnp.dtype(x2d.dtype).itemsize
    out_itemsize = 4  # f32 output

    # Generation-aware VMEM budget (64 MiB/TC on v7x, 128 MiB on v5e/v6e).
    try:
        vmem_capacity = int(pltpu.get_tpu_info().vmem_capacity_bytes)
    except Exception:
        vmem_capacity = 64 * 1024 * 1024  # conservative (v7x) fallback
    budget = int(0.80 * vmem_capacity)

    w_bytes_1buf = num_moe_pad * dim * 2  # bf16 weight, one buffer
    # Per-row pipeline cost: double-buffered x tile + double-buffered f32 out tile.
    per_row = 2 * dim * x_itemsize + 2 * num_moe_pad * out_itemsize
    # Size assuming up to 2 weight buffers (covers the fallback path too).
    max_rows = max(16, _round_down(max(0, budget - 2 * w_bytes_1buf) // per_row, 16))

    if tile_t is None:
        tile_t = 2048  # mem-bound: big tiles amortize ~0.35 us/step overhead
    # Keep >= 2 grid steps when possible so v7x can megacore-shard the grid.
    half_cap = _round_up(pl.cdiv(T, 2), 16)
    TILE_T = max(16, min(_round_up(tile_t, 16), max_rows, half_cap))

    grid = (pl.cdiv(T, TILE_T),)
    kernel = functools.partial(_gating_kernel, num_moe=num_moe)

    def build(weight_single_buffered: bool):
        w_bufs = 1 if weight_single_buffered else 2
        needed = (2 * TILE_T * dim * x_itemsize
                  + w_bufs * w_bytes_1buf
                  + 2 * TILE_T * num_moe_pad * out_itemsize)
        vmem_limit = int(min(0.9 * vmem_capacity,
                             max(needed + (8 << 20), 32 << 20)))
        if weight_single_buffered:
            w_spec = pl.BlockSpec((num_moe_pad, dim), lambda i: (0, 0),
                                  pipeline_mode=pl.Buffered(1))
        else:
            w_spec = pl.BlockSpec((num_moe_pad, dim), lambda i: (0, 0))
        return pl.pallas_call(
            kernel,
            out_shape=jax.ShapeDtypeStruct((T, num_moe_pad), jnp.float32),
            grid_spec=pltpu.PrefetchScalarGridSpec(
                num_scalar_prefetch=0,
                grid=grid,
                in_specs=[
                    pl.BlockSpec((TILE_T, dim), lambda i: (i, 0)),
                    w_spec,  # weight resident across the whole grid
                ],
                out_specs=pl.BlockSpec((TILE_T, num_moe_pad), lambda i: (i, 0)),
            ),
            compiler_params=pltpu.CompilerParams(
                dimension_semantics=("parallel",),
                vmem_limit_bytes=vmem_limit,
            ),
        )

    try:
        probs_pad = build(True)(x2d, w_c)
    except Exception:
        # pipeline_mode=Buffered(1) not supported by this jax version/lowering:
        # fall back to the default double-buffered weight spec.
        probs_pad = build(False)(x2d, w_c)

    if return_padded or num_moe_pad == num_moe:
        out = probs_pad
        n_out = num_moe_pad
    else:
        # Narrowing relayout; callers that can consume the padded block should
        # pass return_padded=True to skip this extra HBM pass.
        out = probs_pad[:, :num_moe]
        n_out = num_moe
    return out.reshape(*lead, n_out)


if __name__ == "__main__":
    # Small shapes consistent with the module: (num_groups, tokens_per_group, dim)
    num_groups, tokens_per_group, dim = 2, 8, 32
    num_moe = 8

    key = jax.random.PRNGKey(0)
    kx, kw = jax.random.split(key)

    x = jax.random.normal(kx, (num_groups, tokens_per_group, dim), dtype=jnp.float32)
    # Deterministic synthetic weight, Kaiming-uniform-like scale as in nn.Linear init.
    bound = 1.0 / (dim ** 0.5)
    weight = jax.random.uniform(kw, (num_moe, dim), minval=-bound, maxval=bound,
                                dtype=jnp.float32)

    probs = jax.block_until_ready(dense_gating_forward(x, weight))

    # Reference check in plain JAX, using the same bf16 contraction precision.
    x_c = x.astype(jnp.bfloat16).astype(jnp.float32)
    w_c = weight.astype(jnp.bfloat16).astype(jnp.float32)
    ref = jax.nn.softmax(x_c @ w_c.T, axis=-1)

    assert probs.shape == (num_groups, tokens_per_group, num_moe)
    assert jnp.allclose(probs, ref, atol=1e-4, rtol=1e-4)
    assert jnp.allclose(probs.sum(-1), 1.0, atol=1e-5)

    # Also exercise the slice-free (padded) output path.
    probs_padded = jax.block_until_ready(
        dense_gating_forward(x, weight, return_padded=True))
    assert probs_padded.shape == (num_groups, tokens_per_group, 128)
    assert jnp.allclose(probs_padded[..., :num_moe], ref, atol=1e-4, rtol=1e-4)
    assert jnp.allclose(probs_padded[..., num_moe:], 0.0)

    print("KERNEL_OK")
</pallas_src>

<mosaic_0001>
module attributes {stable_mosaic.version = 11 : i64} {
  func.func @_gating_kernel(%arg0: i32, %arg1: memref<16x32xf32, #tpu.memory_space<vmem>>, %arg2: memref<128x32xbf16, #tpu.memory_space<vmem>>, %arg3: memref<16x128xf32, #tpu.memory_space<vmem>>) attributes {dimension_semantics = [#tpu.dimension_semantics<parallel>], iteration_bounds = array<i64: 1>, scalar_prefetch = 0 : i64, scratch_operands = 0 : i64, tpu.core_type = #tpu.core_type<tc>, window_params = [{transform_indices = @transform_0, window_bounds = array<i64: 16, 32>}, {pipeline_mode = #tpu.pipeline_mode<synchronous>, transform_indices = @transform_1, window_bounds = array<i64: 128, 32>}, {transform_indices = @transform_2, window_bounds = array<i64: 16, 128>}]} {
    %c0 = arith.constant 0 : index
    %c0_0 = arith.constant 0 : index
    %0 = vector.load %arg1[%c0, %c0_0] : memref<16x32xf32, #tpu.memory_space<vmem>>, vector<16x32xf32>
    %1 = arith.truncf %0 : vector<16x32xf32> to vector<16x32xbf16>
    %c0_1 = arith.constant 0 : index
    %c0_2 = arith.constant 0 : index
    %2 = vector.load %arg2[%c0_1, %c0_2] : memref<128x32xbf16, #tpu.memory_space<vmem>>, vector<128x32xbf16>
    %cst = arith.constant dense<0.000000e+00> : vector<16x128xf32>
    %3 = tpu.matmul %1, %2, %cst {dimension_numbers = #tpu.dot_dimension_numbers<[1], [1], [0], [0], [0, 0, 1, 0], [], []>} : vector<16x32xbf16>, vector<128x32xbf16>, vector<16x128xf32> -> vector<16x128xf32>
    %4 = tpu.iota {dimensions = array<i32: 1>} : vector<16x128xi32>
    %c8_i32 = arith.constant 8 : i32
    %5 = vector.broadcast %c8_i32 : i32 to vector<16x128xi32>
    %6 = arith.cmpi slt, %4, %5 : vector<16x128xi32>
    %cst_3 = arith.constant 0xFF800000 : f32
    %7 = vector.broadcast %cst_3 : f32 to vector<16x128xf32>
    %8 = arith.select %6, %3, %7 : vector<16x128xi1>, vector<16x128xf32>
    %cst_4 = arith.constant dense<0xFF800000> : vector<16xf32>
    %9 = vector.multi_reduction <maximumf>, %8, %cst_4 [1] : vector<16x128xf32> to vector<16xf32>
    %10 = vector.shape_cast %9 : vector<16xf32> to vector<16x1xf32>
    %11 = vector.broadcast %10 : vector<16x1xf32> to vector<16x128xf32>
    %12 = arith.subf %8, %11 : vector<16x128xf32>
    %13 = math.exp %12 : vector<16x128xf32>
    %cst_5 = arith.constant dense<0.000000e+00> : vector<16xf32>
    %14 = vector.multi_reduction <add>, %13, %cst_5 [1] : vector<16x128xf32> to vector<16xf32>
    %15 = vector.shape_cast %14 : vector<16xf32> to vector<16x1xf32>
    %16 = tpu.reciprocal %15 : vector<16x1xf32> -> vector<16x1xf32>
    %17 = vector.broadcast %16 : vector<16x1xf32> to vector<16x128xf32>
    %18 = arith.mulf %13, %17 : vector<16x128xf32>
    %c0_6 = arith.constant 0 : index
    %c0_7 = arith.constant 0 : index
    %19 = vector.load %arg3[%c0_6, %c0_7] : memref<16x128xf32, #tpu.memory_space<vmem>>, vector<16x128xf32>
    tpu.vector_store %arg3[%c0_6, %c0_7], %18 {strides = array<i32>} : memref<16x128xf32, #tpu.memory_space<vmem>>, vector<16x128xf32>,
    return
  }
  func.func @transform_0(%arg0: i32) -> (i32, i32) {
    %c0_i32 = arith.constant 0 : i32
    %c0_i32_0 = arith.constant 0 : i32
    return %arg0, %c0_i32 : i32, i32
  }
  func.func @transform_1(%arg0: i32) -> (i32, i32) {
    %c0_i32 = arith.constant 0 : i32
    %c0_i32_0 = arith.constant 0 : i32
    %c0_i32_1 = arith.constant 0 : i32
    return %c0_i32, %c0_i32_0 : i32, i32
  }
  func.func @transform_2(%arg0: i32) -> (i32, i32) {
    %c0_i32 = arith.constant 0 : i32
    %c0_i32_0 = arith.constant 0 : i32
    return %arg0, %c0_i32 : i32, i32
  }
}

module attributes {stable_mosaic.version = 11 : i64} {
  func.func @_gating_kernel(%arg0: i32, %arg1: memref<16x32xf32, #tpu.memory_space<vmem>>, %arg2: memref<128x32xbf16, #tpu.memory_space<vmem>>, %arg3: memref<16x128xf32, #tpu.memory_space<vmem>>) attributes {dimension_semantics = [#tpu.dimension_semantics<parallel>], iteration_bounds = array<i64: 1>, scalar_prefetch = 0 : i64, scratch_operands = 0 : i64, tpu.core_type = #tpu.core_type<tc>, window_params = [{transform_indices = @transform_0, window_bounds = array<i64: 16, 32>}, {pipeline_mode = #tpu.pipeline_mode<synchronous>, transform_indices = @transform_1, window_bounds = array<i64: 128, 32>}, {transform_indices = @transform_2, window_bounds = array<i64: 16, 128>}]} {
    %c0 = arith.constant 0 : index
    %c0_0 = arith.constant 0 : index
    %0 = vector.load %arg1[%c0, %c0_0] : memref<16x32xf32, #tpu.memory_space<vmem>>, vector<16x32xf32>
    %1 = arith.truncf %0 : vector<16x32xf32> to vector<16x32xbf16>
    %c0_1 = arith.constant 0 : index
    %c0_2 = arith.constant 0 : index
    %2 = vector.load %arg2[%c0_1, %c0_2] : memref<128x32xbf16, #tpu.memory_space<vmem>>, vector<128x32xbf16>
    %cst = arith.constant dense<0.000000e+00> : vector<16x128xf32>
    %3 = tpu.matmul %1, %2, %cst {dimension_numbers = #tpu.dot_dimension_numbers<[1], [1], [0], [0], [0, 0, 1, 0], [], []>} : vector<16x32xbf16>, vector<128x32xbf16>, vector<16x128xf32> -> vector<16x128xf32>
    %4 = tpu.iota {dimensions = array<i32: 1>} : vector<16x128xi32>
    %c8_i32 = arith.constant 8 : i32
    %5 = vector.broadcast %c8_i32 : i32 to vector<16x128xi32>
    %6 = arith.cmpi slt, %4, %5 : vector<16x128xi32>
    %cst_3 = arith.constant 0xFF800000 : f32
    %7 = vector.broadcast %cst_3 : f32 to vector<16x128xf32>
    %8 = arith.select %6, %3, %7 : vector<16x128xi1>, vector<16x128xf32>
    %cst_4 = arith.constant dense<0xFF800000> : vector<16xf32>
    %9 = vector.multi_reduction <maximumf>, %8, %cst_4 [1] : vector<16x128xf32> to vector<16xf32>
    %10 = vector.shape_cast %9 : vector<16xf32> to vector<16x1xf32>
    %11 = vector.broadcast %10 : vector<16x1xf32> to vector<16x128xf32>
    %12 = arith.subf %8, %11 : vector<16x128xf32>
    %13 = math.exp %12 : vector<16x128xf32>
    %cst_5 = arith.constant dense<0.000000e+00> : vector<16xf32>
    %14 = vector.multi_reduction <add>, %13, %cst_5 [1] : vector<16x128xf32> to vector<16xf32>
    %15 = vector.shape_cast %14 : vector<16xf32> to vector<16x1xf32>
    %16 = tpu.reciprocal %15 : vector<16x1xf32> -> vector<16x1xf32>
    %17 = vector.broadcast %16 : vector<16x1xf32> to vector<16x128xf32>
    %18 = arith.mulf %13, %17 : vector<16x128xf32>
    %c0_6 = arith.constant 0 : index
    %c0_7 = arith.constant 0 : index
    %19 = vector.load %arg3[%c0_6, %c0_7] : memref<16x128xf32, #tpu.memory_space<vmem>>, vector<16x128xf32>
    tpu.vector_store %arg3[%c0_6, %c0_7], %18 {strides = array<i32>} : memref<16x128xf32, #tpu.memory_space<vmem>>, vector<16x128xf32>,
    return
  }
  func.func @transform_0(%arg0: i32) -> (i32, i32) {
    %c0_i32 = arith.constant 0 : i32
    %c0_i32_0 = arith.constant 0 : i32
    return %arg0, %c0_i32 : i32, i32
  }
  func.func @transform_1(%arg0: i32) -> (i32, i32) {
    %c0_i32 = arith.constant 0 : i32
    %c0_i32_0 = arith.constant 0 : i32
    %c0_i32_1 = arith.constant 0 : i32
    return %c0_i32, %c0_i32_0 : i32, i32
  }
  func.func @transform_2(%arg0: i32) -> (i32, i32) {
    %c0_i32 = arith.constant 0 : i32
    %c0_i32_0 = arith.constant 0 : i32
    return %arg0, %c0_i32 : i32, i32
  }
}

</mosaic_0001>

<llo_original>
// kernel: tpu_custom_call.1
$region0: #{tpu_custom_call.1}
  #allocation0 [shape = 'u32[]', space=smem, size = 0x4, offset = 0x4, fixed_abs, tag = 'smem constant byte address 0x4 - core index']
  #allocation1 [shape = 'u32[72,128]{1,0:T(1,128)}', space=vmem, size = 0x9000, scoped, tag = 'internal scratch']
  %s0 = inlined_call_operand.vmem [shape: f32[16,32], index: 0, kind: input, shape index: {}]
  %s1 = inlined_call_operand.vmem [shape: bf16[128,32], index: 1, kind: input, shape index: {}]
  %s2 = inlined_call_operand.hbm [shape: f32[16,128], index: 2, kind: output, shape index: {}]
  %s3 = sld [smem:[#allocation0]]
  $region18: #{tpu_custom_call.1} parent=0
    _
  %s5 = ssub.s32 1, %s3
  %s6 = scalar_select 0, %s5, %s3
  $region1: #{tpu_custom_call.1} parent=0
    #allocation2 [shape = 'u8[8192]{0}', space=vmem, size = 0x2000, scoped, tag = 'output window, operand 0, single buffered']
    #allocation3 [shape = 's32[1]{0}', space=sflag, size = 0x4, scoped, tag = 'scoped memory for tpu_custom_call.1']
    %7 = vsyncpa [#allocation3], 0
    // Predicated region
    $region2: #{tpu_custom_call.1} parent=1 // pred_check
      _
    $region3: #{tpu_custom_call.1} parent=1 // pred_check_branch
      %9 = sbr.rel (0) target = $region5
    $region4: #{tpu_custom_call.1} parent=1 // pred_region
      _
    $region5: #{tpu_custom_call.1} parent=1 // pred_fallthru
      _
    // Predicated region
    $region6: #{tpu_custom_call.1} parent=1 // pred_check
      _
    $region7: #{tpu_custom_call.1} parent=1 // pred_check_branch
      %11 = sbr.rel (0) target = $region9
    $region8: #{tpu_custom_call.1} parent=1 // pred_region
      _
    $region9: #{tpu_custom_call.1} parent=1 // pred_fallthru
      _
    %v12 = vld [vmem:[%s0] sm:$0xff]
    %v13 = vld [vmem:[%s0 + $0x8] sm:$0xff]
    %v14 = vpack.c.bf16 %v13, %v12
    %v15 = vld [vmem:[%s1] sm:$0xf]
    %v16 = vld [vmem:[%s1 + $0x4] sm:$0xf]
    %v17 = vld [vmem:[%s1 + $0x8] sm:$0xf]
    %v18 = vld [vmem:[%s1 + $0xc] sm:$0xf]
    %v19 = vld [vmem:[%s1 + $0x10] sm:$0xf]
    %v20 = vld [vmem:[%s1 + $0x14] sm:$0xf]
    %v21 = vld [vmem:[%s1 + $0x18] sm:$0xf]
    %v22 = vld [vmem:[%s1 + $0x1c] sm:$0xf]
    %v23 = vld [vmem:[%s1 + $0x20] sm:$0xf]
    %v24 = vld [vmem:[%s1 + $0x24] sm:$0xf]
    %v25 = vld [vmem:[%s1 + $0x28] sm:$0xf]
    %v26 = vld [vmem:[%s1 + $0x2c] sm:$0xf]
    %v27 = vld [vmem:[%s1 + $0x30] sm:$0xf]
    %v28 = vld [vmem:[%s1 + $0x34] sm:$0xf]
    %v29 = vld [vmem:[%s1 + $0x38] sm:$0xf]
    %v30 = vld [vmem:[%s1 + $0x3c] sm:$0xf]
    %v47 = vunpack.c.l.b16 %v15
    %v48 = vunpack.c.l.b16 %v16
    %v49 = vunpack.c.l.b16 %v17
    %v50 = vunpack.c.l.b16 %v18
    %v51 = vunpack.c.l.b16 %v19
    %v52 = vunpack.c.l.b16 %v20
    %v53 = vunpack.c.l.b16 %v21
    %v54 = vunpack.c.l.b16 %v22
    %v55 = vunpack.c.l.b16 %v23
    %v56 = vunpack.c.l.b16 %v24
    %v57 = vunpack.c.l.b16 %v25
    %v58 = vunpack.c.l.b16 %v26
    %v59 = vunpack.c.l.b16 %v27
    %v60 = vunpack.c.l.b16 %v28
    %v61 = vunpack.c.l.b16 %v29
    %v62 = vunpack.c.l.b16 %v30
    %v63 = vpack.c.b16 %v48, %v47
    %v64 = vpack.c.b16 %v50, %v49
    %v65 = vpack.c.b16 %v52, %v51
    %v66 = vpack.c.b16 %v54, %v53
    %v67 = vpack.c.b16 %v56, %v55
    %v68 = vpack.c.b16 %v58, %v57
    %v69 = vpack.c.b16 %v60, %v59
    %v70 = vpack.c.b16 %v62, %v61
    %vm71 = vcmask 261120
    %v73 = vsel %vm71, %v14, 0
    %v76 = vsel %vm71, %v63, 0
    %v79 = vsel %vm71, %v64, 0
    %v82 = vsel %vm71, %v65, 0
    %v85 = vsel %vm71, %v66, 0
    %v88 = vsel %vm71, %v67, 0
    %v91 = vsel %vm71, %v68, 0
    %v94 = vsel %vm71, %v69, 0
    %v97 = vsel %vm71, %v70, 0
    %99 = vmatpush.bf16.xpose.msra.mxu0 %v97
    %100 = vmatpush.bf16.xpose.msra.mxu0 %v94
    %101 = vmatpush.bf16.xpose.msra.mxu0 %v91
    %102 = vmatpush.bf16.xpose.msra.mxu0 %v88
    %103 = vmatpush.bf16.xpose.msra.mxu0 %v85
    %104 = vmatpush.bf16.xpose.msra.mxu0 %v82
    %105 = vmatpush.bf16.xpose.msra.mxu0 %v79
    %106 = vmatpush.bf16.xpose.msra.mxu0 %v76
    %107 = vmatmul.bf16.gmra.mxu0 %v73
    %v108 = vpop.f32.mrf.mxu0
    %v109 = vadd.f32 0.0, %v108
    %v110 = vpop.f32.mrf.mxu0
    %v111 = vadd.f32 0.0, %v110
    %112 = vdwg.mxu0
    %v113 = vlaneseq
    %v114 = vand.u32 %v113, 127
    %vm115 = vcmp.lt.s32.totalorder %v114, 8
    %v116 = vsel %vm115, %v109, -inf
    %v117 = vsel %vm115, %v111, -inf
    %118 = vmax.xlane.f32.xlu0 %v116
    %v119 = vpop.xlane.xlu0 %118
    %120 = vmax.xlane.f32.xlu0 %v117
    %v121 = vpop.xlane.xlu0 %120
    %v122 = vsub.f32 %v116, %v119
    %v123 = vsub.f32 %v117, %v121
    %v124 = vmul.f32 %v122, 1.442695
    %v125 = vpow.pop %v124
    %v126 = vmul.f32 %v123, 1.442695
    %v127 = vpow.pop %v126
    %128 = vadd.xlane.f32.xlu0 %v125
    %v129 = vpop.xlane.xlu0 %128
    %130 = vadd.xlane.f32.xlu0 %v127
    %v131 = vpop.xlane.xlu0 %130
    %v132 = vrcp.pop %v129
    %v133 = vmul.f32 %v129, %v132
    %v134 = vsub.f32 1.0, %v133
    %v135 = vmul.f32 %v132, %v134
    %v136 = vadd.f32 %v132, %v135
    %vm137 = vweird.f32 %v129
    %vm138 = vweird.f32 %v132
    %vm139 = vmor %vm137, %vm138
    %v140 = vsel %vm139, %v132, %v136
    %v141 = vand.u32 2147483647, %v129
    %vm142 = vcmp.eq.f32.partialorder %v141, 8.507059e+37
    %v143 = vand.u32 %v129, 2147483648
    %v144 = vor.u32 1.1754944e-38, %v143
    %v145 = vsel %vm142, %v144, %v140
    %v146 = vrcp.pop %v131
    %v147 = vmul.f32 %v131, %v146
    %v148 = vsub.f32 1.0, %v147
    %v149 = vmul.f32 %v146, %v148
    %v150 = vadd.f32 %v146, %v149
    %vm151 = vweird.f32 %v131
    %vm152 = vweird.f32 %v146
    %vm153 = vmor %vm151, %vm152
    %v154 = vsel %vm153, %v146, %v150
    %v155 = vand.u32 2147483647, %v131
    %vm156 = vcmp.eq.f32.partialorder %v155, 8.507059e+37
    %v157 = vand.u32 %v131, 2147483648
    %v158 = vor.u32 1.1754944e-38, %v157
    %v159 = vsel %vm156, %v158, %v154
    %v160 = vmul.f32 %v125, %v145
    %v161 = vmul.f32 %v127, %v159
    %162 = vst [vmem:[#allocation2] sm:$0xff] %v160
    %163 = vst [vmem:[#allocation2 + $0x8] sm:$0xff] %v161
    // Predicated region
    $region10: #{tpu_custom_call.1} parent=1 // pred_check
      _
    $region11: #{tpu_custom_call.1} parent=1 // pred_check_branch
      %165 = sbr.rel (0) target = $region13
    $region12: #{tpu_custom_call.1} parent=1 // pred_region
      %167 = vsyncadd [#allocation3], 0
      %s168 = sshll.u32 [#allocation2], 4
      %s169 = int_to_ptr.vmem [resolvable:$true] %s168
      %s170 = sshll.u32 %s2, 4
      %s171 = int_to_ptr.hbm [resolvable:$true] %s170
      %176 = dma.vmem_to_hbm [thread:$0]  %s169, 256, %s171, [#allocation3], 128, 128, 8
    $region13: #{tpu_custom_call.1} parent=1 // pred_fallthru
      _
    // Predicated region
    $region14: #{tpu_custom_call.1} parent=1 // pred_check
      _
    $region15: #{tpu_custom_call.1} parent=1 // pred_check_branch
      %178 = sbr.rel (0) target = $region17
    $region16: #{tpu_custom_call.1} parent=1 // pred_region
      %180 = dma.done [#allocation3], 256
    $region17: #{tpu_custom_call.1} parent=1 // pred_fallthru
      _
    %181 = vsyncpa [#allocation3], 1

// kernel: tpu_custom_call.1
$region0: #{tpu_custom_call.1}
  #allocation0 [shape = 'u32[]', space=smem, size = 0x4, offset = 0x4, fixed_abs, tag = 'smem constant byte address 0x4 - core index']
  #allocation1 [shape = 'u32[72,128]{1,0:T(1,128)}', space=vmem, size = 0x9000, scoped, tag = 'internal scratch']
  %s0 = inlined_call_operand.vmem [shape: f32[16,32], index: 0, kind: input, shape index: {}]
  %s1 = inlined_call_operand.vmem [shape: bf16[128,32], index: 1, kind: input, shape index: {}]
  %s2 = inlined_call_operand.hbm [shape: f32[16,128], index: 2, kind: output, shape index: {}]
  %s3 = sld [smem:[#allocation0]]
  $region18: #{tpu_custom_call.1} parent=0
    _
  %s5 = ssub.s32 1, %s3
  %s6 = scalar_select 0, %s5, %s3
  $region1: #{tpu_custom_call.1} parent=0
    #allocation2 [shape = 'u8[8192]{0}', space=vmem, size = 0x2000, scoped, tag = 'output window, operand 0, single buffered']
    #allocation3 [shape = 's32[1]{0}', space=sflag, size = 0x4, scoped, tag = 'scoped memory for tpu_custom_call.1']
    %7 = vsyncpa [#allocation3], 0
    // Predicated region
    $region2: #{tpu_custom_call.1} parent=1 // pred_check
      _
    $region3: #{tpu_custom_call.1} parent=1 // pred_check_branch
      %9 = sbr.rel (0) target = $region5
    $region4: #{tpu_custom_call.1} parent=1 // pred_region
      _
    $region5: #{tpu_custom_call.1} parent=1 // pred_fallthru
      _
    // Predicated region
    $region6: #{tpu_custom_call.1} parent=1 // pred_check
      _
    $region7: #{tpu_custom_call.1} parent=1 // pred_check_branch
      %11 = sbr.rel (0) target = $region9
    $region8: #{tpu_custom_call.1} parent=1 // pred_region
      _
    $region9: #{tpu_custom_call.1} parent=1 // pred_fallthru
      _
    %v12 = vld [vmem:[%s0] sm:$0xff]
    %v13 = vld [vmem:[%s0 + $0x8] sm:$0xff]
    %v14 = vpack.c.bf16 %v13, %v12
    %v15 = vld [vmem:[%s1] sm:$0xf]
    %v16 = vld [vmem:[%s1 + $0x4] sm:$0xf]
    %v17 = vld [vmem:[%s1 + $0x8] sm:$0xf]
    %v18 = vld [vmem:[%s1 + $0xc] sm:$0xf]
    %v19 = vld [vmem:[%s1 + $0x10] sm:$0xf]
    %v20 = vld [vmem:[%s1 + $0x14] sm:$0xf]
    %v21 = vld [vmem:[%s1 + $0x18] sm:$0xf]
    %v22 = vld [vmem:[%s1 + $0x1c] sm:$0xf]
    %v23 = vld [vmem:[%s1 + $0x20] sm:$0xf]
    %v24 = vld [vmem:[%s1 + $0x24] sm:$0xf]
    %v25 = vld [vmem:[%s1 + $0x28] sm:$0xf]
    %v26 = vld [vmem:[%s1 + $0x2c] sm:$0xf]
    %v27 = vld [vmem:[%s1 + $0x30] sm:$0xf]
    %v28 = vld [vmem:[%s1 + $0x34] sm:$0xf]
    %v29 = vld [vmem:[%s1 + $0x38] sm:$0xf]
    %v30 = vld [vmem:[%s1 + $0x3c] sm:$0xf]
    %v47 = vunpack.c.l.b16 %v15
    %v48 = vunpack.c.l.b16 %v16
    %v49 = vunpack.c.l.b16 %v17
    %v50 = vunpack.c.l.b16 %v18
    %v51 = vunpack.c.l.b16 %v19
    %v52 = vunpack.c.l.b16 %v20
    %v53 = vunpack.c.l.b16 %v21
    %v54 = vunpack.c.l.b16 %v22
    %v55 = vunpack.c.l.b16 %v23
    %v56 = vunpack.c.l.b16 %v24
    %v57 = vunpack.c.l.b16 %v25
    %v58 = vunpack.c.l.b16 %v26
    %v59 = vunpack.c.l.b16 %v27
    %v60 = vunpack.c.l.b16 %v28
    %v61 = vunpack.c.l.b16 %v29
    %v62 = vunpack.c.l.b16 %v30
    %v63 = vpack.c.b16 %v48, %v47
    %v64 = vpack.c.b16 %v50, %v49
    %v65 = vpack.c.b16 %v52, %v51
    %v66 = vpack.c.b16 %v54, %v53
    %v67 = vpack.c.b16 %v56, %v55
    %v68 = vpack.c.b16 %v58, %v57
    %v69 = vpack.c.b16 %v60, %v59
    %v70 = vpack.c.b16 %v62, %v61
    %vm71 = vcmask 261120
    %v73 = vsel %vm71, %v14, 0
    %v76 = vsel %vm71, %v63, 0
    %v79 = vsel %vm71, %v64, 0
    %v82 = vsel %vm71, %v65, 0
    %v85 = vsel %vm71, %v66, 0
    %v88 = vsel %vm71, %v67, 0
    %v91 = vsel %vm71, %v68, 0
    %v94 = vsel %vm71, %v69, 0
    %v97 = vsel %vm71, %v70, 0
    %99 = vmatpush.bf16.xpose.msra.mxu0 %v97
    %100 = vmatpush.bf16.xpose.msra.mxu0 %v94
    %101 = vmatpush.bf16.xpose.msra.mxu0 %v91
    %102 = vmatpush.bf16.xpose.msra.mxu0 %v88
    %103 = vmatpush.bf16.xpose.msra.mxu0 %v85
    %104 = vmatpush.bf16.xpose.msra.mxu0 %v82
    %105 = vmatpush.bf16.xpose.msra.mxu0 %v79
    %106 = vmatpush.bf16.xpose.msra.mxu0 %v76
    %107 = vmatmul.bf16.gmra.mxu0 %v73
    %v108 = vpop.f32.mrf.mxu0
    %v109 = vadd.f32 0.0, %v108
    %v110 = vpop.f32.mrf.mxu0
    %v111 = vadd.f32 0.0, %v110
    %112 = vdwg.mxu0
    %v113 = vlaneseq
    %v114 = vand.u32 %v113, 127
    %vm115 = vcmp.lt.s32.totalorder %v114, 8
    %v116 = vsel %vm115, %v109, -inf
    %v117 = vsel %vm115, %v111, -inf
    %118 = vmax.xlane.f32.xlu0 %v116
    %v119 = vpop.xlane.xlu0 %118
    %120 = vmax.xlane.f32.xlu0 %v117
    %v121 = vpop.xlane.xlu0 %120
    %v122 = vsub.f32 %v116, %v119
    %v123 = vsub.f32 %v117, %v121
    %v124 = vmul.f32 %v122, 1.442695
    %v125 = vpow.pop %v124
    %v126 = vmul.f32 %v123, 1.442695
    %v127 = vpow.pop %v126
    %128 = vadd.xlane.f32.xlu0 %v125
    %v129 = vpop.xlane.xlu0 %128
    %130 = vadd.xlane.f32.xlu0 %v127
    %v131 = vpop.xlane.xlu0 %130
    %v132 = vrcp.pop %v129
    %v133 = vmul.f32 %v129, %v132
    %v134 = vsub.f32 1.0, %v133
    %v135 = vmul.f32 %v132, %v134
    %v136 = vadd.f32 %v132, %v135
    %vm137 = vweird.f32 %v129
    %vm138 = vweird.f32 %v132
    %vm139 = vmor %vm137, %vm138
    %v140 = vsel %vm139, %v132, %v136
    %v141 = vand.u32 2147483647, %v129
    %vm142 = vcmp.eq.f32.partialorder %v141, 8.507059e+37
    %v143 = vand.u32 %v129, 2147483648
    %v144 = vor.u32 1.1754944e-38, %v143
    %v145 = vsel %vm142, %v144, %v140
    %v146 = vrcp.pop %v131
    %v147 = vmul.f32 %v131, %v146
    %v148 = vsub.f32 1.0, %v147
    %v149 = vmul.f32 %v146, %v148
    %v150 = vadd.f32 %v146, %v149
    %vm151 = vweird.f32 %v131
    %vm152 = vweird.f32 %v146
    %vm153 = vmor %vm151, %vm152
    %v154 = vsel %vm153, %v146, %v150
    %v155 = vand.u32 2147483647, %v131
    %vm156 = vcmp.eq.f32.partialorder %v155, 8.507059e+37
    %v157 = vand.u32 %v131, 2147483648
    %v158 = vor.u32 1.1754944e-38, %v157
    %v159 = vsel %vm156, %v158, %v154
    %v160 = vmul.f32 %v125, %v145
    %v161 = vmul.f32 %v127, %v159
    %162 = vst [vmem:[#allocation2] sm:$0xff] %v160
    %163 = vst [vmem:[#allocation2 + $0x8] sm:$0xff] %v161
    // Predicated region
    $region10: #{tpu_custom_call.1} parent=1 // pred_check
      _
    $region11: #{tpu_custom_call.1} parent=1 // pred_check_branch
      %165 = sbr.rel (0) target = $region13
    $region12: #{tpu_custom_call.1} parent=1 // pred_region
      %167 = vsyncadd [#allocation3], 0
      %s168 = sshll.u32 [#allocation2], 4
      %s169 = int_to_ptr.vmem [resolvable:$true] %s168
      %s170 = sshll.u32 %s2, 4
      %s171 = int_to_ptr.hbm [resolvable:$true] %s170
      %176 = dma.vmem_to_hbm [thread:$0]  %s169, 256, %s171, [#allocation3], 128, 128, 8
    $region13: #{tpu_custom_call.1} parent=1 // pred_fallthru
      _
    // Predicated region
    $region14: #{tpu_custom_call.1} parent=1 // pred_check
      _
    $region15: #{tpu_custom_call.1} parent=1 // pred_check_branch
      %178 = sbr.rel (0) target = $region17
    $region16: #{tpu_custom_call.1} parent=1 // pred_region
      %180 = dma.done [#allocation3], 256
    $region17: #{tpu_custom_call.1} parent=1 // pred_fallthru
      _
    %181 = vsyncpa [#allocation3], 1

</llo_original>
